<compile_context>
chip_gen: v7x
topology: tpu7x:2x2x1
jax: 0.10.0
libtpu: 0.0.40
codegen_flags: <defaults>
</compile_context>

<pallas_src>
import functools
import re

import jax
import jax.numpy as jnp
from jax.experimental import pallas as pl
from jax.experimental.pallas import tpu as pltpu

_H = 64      # hidden width of the value MLP
_LANE = 128  # TPU lane count


def _tpu_generation() -> int:
    """Best-effort TPU generation (5, 6, 7, ...); 0 if unknown."""
    try:
        kind = jax.devices()[0].device_kind
    except Exception:
        return 0
    if "tpu" not in kind.lower():
        return 0
    m = re.search(r"(\d+)", kind)
    return int(m.group(1)) if m else 0


def _vnet_kernel(x_ref, w1_ref, b1_ref, w2_ref, b2_ref, w3_ref, b3_ref, out_ref,
                 *, act_dtype):
    # x_ref: (tb, D) f32, batch-major straight from HBM.  Transpose in-kernel
    # (XLU; its slot is idle in this kernel) so the batch rides the 128-lane
    # axis for all downstream work and the output store is lane-dense.
    xt = x_ref[...].T                                                    # (D, tb) f32
    a1 = jnp.dot(w1_ref[...], xt, preferred_element_type=jnp.float32) + b1_ref[...]
    h1 = jnp.tanh(a1.astype(act_dtype))                                  # (H, tb)
    a2 = jnp.dot(w2_ref[...], h1, preferred_element_type=jnp.float32) + b2_ref[...]
    h2 = jnp.tanh(a2.astype(act_dtype))                                  # (H, tb)
    # fc3 has a single output feature: VPU multiply + sublane reduce instead of
    # an M=1 MXU matmul.
    v = jnp.sum(w3_ref[...] * h2.astype(jnp.float32), axis=0, keepdims=True)
    out_ref[...] = v + b3_ref[0]                                         # (1, tb) lane-dense


def _select_batch_tile(B, D, act_bytes, batch_tile, gen):
    """Pick a lane-aligned batch tile from a VMEM footprint model."""
    b128 = pl.cdiv(B, _LANE) * _LANE
    # Physical VMEM bytes per batch column (lane/sublane padding included):
    #   double-buffered (tb, D) obs block + double-buffered (1, tb) out block
    #   + transposed obs copy + two (f32 acc, activation) pairs + fc3 temps.
    obs_col = 2 * (pl.cdiv(D, _LANE) * _LANE) * 4
    out_col = 2 * 8 * 4
    inter_col = (pl.cdiv(D, 8) * 8 * 4
                 + 2 * (_H * 4 + _H * act_bytes)
                 + _H * 4 + 8 * 4)
    per_col = obs_col + out_col + inter_col

    budget_auto = 12 << 20   # target per-tile footprint (safe on v5e/v6e/v7x)
    budget_max = 24 << 20    # hard cap, even for user overrides (v7x: 64 MiB phys)
    tb_auto = min(8192, (budget_auto // per_col) // _LANE * _LANE)
    tb_cap = (budget_max // per_col) // _LANE * _LANE

    if batch_tile is None:
        tb = tb_auto
        # v7x-class chips have 2 TensorCores: keep both busy (>=4 grid steps)
        # once the batch is big enough.  Single-TC chips never split a batch
        # that already fits one tile.
        if gen >= 7 and b128 >= 4 * _LANE:
            tb = min(tb, (b128 // 4) // _LANE * _LANE)
    else:
        tb = min((int(batch_tile) // _LANE) * _LANE, tb_cap)
    tb = max(_LANE, min(tb, b128))

    vmem_limit = int(min(48 << 20, max(16 << 20, per_col * tb * 3 // 2 + (2 << 20))))
    return tb, vmem_limit


def v_network_forward(obs, params, *, batch_tile=None):
    """Fused Pallas forward for V_Network.  obs: (B, obs_dim) f32 -> (B, 1) f32."""
    w1, b1, w2, b2, w3, b3 = params
    B, D = obs.shape
    H = w1.shape[0]
    assert H == _H and w1.shape == (H, D) and w2.shape == (H, H) and w3.shape == (1, H)

    gen = _tpu_generation()
    bf16_tanh = gen >= 6                   # v6e/v7x EUP has a 2x bf16 path; v5e does not
    act_dtype = jnp.bfloat16 if bf16_tanh else jnp.float32
    act_bytes = 2 if bf16_tanh else 4

    tb, vmem_limit = _select_batch_tile(B, D, act_bytes, batch_tile, gen)
    grid = (pl.cdiv(B, tb),)

    # Tiny parameter reshapes/casts only — no pass over obs.
    w1_in = w1.astype(jnp.float32)                 # layer 1 stays f32 (obs arrives f32)
    b1_in = b1.reshape(H, 1).astype(jnp.float32)
    w2_in = w2.astype(act_dtype)
    b2_in = b2.reshape(H, 1).astype(jnp.float32)
    w3_in = w3.reshape(H, 1).astype(jnp.float32)   # column -> lane-broadcast against h2
    b3_in = b3.reshape(1).astype(jnp.float32)      # single scalar -> SMEM

    rep = lambda shape: pl.BlockSpec(shape, lambda i: (0, 0))
    cost = pl.CostEstimate(
        flops=2 * B * (D * H + H * H + H),
        transcendentals=2 * H * B,
        bytes_accessed=B * D * 4 + B * 4 + (int(w1.size) + int(w2.size) + int(w3.size) + 2 * H + 1) * 4,
    )

    out = pl.pallas_call(
        functools.partial(_vnet_kernel, act_dtype=act_dtype),
        out_shape=jax.ShapeDtypeStruct((1, B), jnp.float32),
        grid_spec=pltpu.PrefetchScalarGridSpec(
            num_scalar_prefetch=0,
            grid=grid,
            in_specs=[
                pl.BlockSpec((tb, D), lambda i: (i, 0)),            # obs tile, batch-major
                rep((H, D)),                                        # w1
                rep((H, 1)),                                        # b1 column
                rep((H, H)),                                        # w2
                rep((H, 1)),                                        # b2 column
                rep((H, 1)),                                        # w3 column
                pl.BlockSpec(memory_space=pltpu.MemorySpace.SMEM),  # b3 scalar
            ],
            out_specs=pl.BlockSpec((1, tb), lambda i: (0, i)),      # lane-dense output
        ),
        compiler_params=pltpu.CompilerParams(
            dimension_semantics=("parallel",),
            vmem_limit_bytes=vmem_limit,
        ),
        cost_estimate=cost,
    )(obs.astype(jnp.float32), w1_in, b1_in, w2_in, b2_in, w3_in, b3_in)

    return out.reshape(B, 1)


def init_v_network_params(key, obs_dim, hidden=64):
    """PyTorch nn.Linear layout: wN is (out_features, in_features), bN is (out_features,)."""
    def linear(k, fan_in, fan_out):
        kw, kb = jax.random.split(k)
        bound = 1.0 / jnp.sqrt(fan_in)
        w = jax.random.uniform(kw, (fan_out, fan_in), jnp.float32, -bound, bound)
        b = jax.random.uniform(kb, (fan_out,), jnp.float32, -bound, bound)
        return w, b

    k1, k2, k3 = jax.random.split(key, 3)
    w1, b1 = linear(k1, obs_dim, hidden)
    w2, b2 = linear(k2, hidden, hidden)
    w3, b3 = linear(k3, hidden, 1)
    return (w1, b1, w2, b2, w3, b3)


def v_network_ref_f32(obs, params):
    w1, b1, w2, b2, w3, b3 = params
    y = jnp.tanh(obs @ w1.T + b1)
    y = jnp.tanh(y @ w2.T + b2)
    return y @ w3.T + b3


def v_network_ref_mirror(obs, params, act_dtype):
    """Mirrors the kernel numerics: f32 layer-1 matmul, `act_dtype` activations / layer-2."""
    w1, b1, w2, b2, w3, b3 = params
    a1 = jnp.dot(obs, w1.T, preferred_element_type=jnp.float32) + b1
    h1 = jnp.tanh(a1.astype(act_dtype))
    a2 = jnp.dot(h1, w2.astype(act_dtype).T, preferred_element_type=jnp.float32) + b2
    h2 = jnp.tanh(a2.astype(act_dtype)).astype(jnp.float32)
    return jnp.dot(h2, w3.T) + b3


if __name__ == "__main__":
    key = jax.random.PRNGKey(0)
    k_obs, k_params = jax.random.split(key)

    B, obs_dim = 384, 16
    obs = jax.random.normal(k_obs, (B, obs_dim), jnp.float32)
    params = init_v_network_params(k_params, obs_dim)

    gen = _tpu_generation()
    act_dtype = jnp.bfloat16 if gen >= 6 else jnp.float32

    # Small explicit tile -> 3 grid steps: exercises the pipelined multi-step path.
    values = jax.block_until_ready(v_network_forward(obs, params, batch_tile=128))
    assert values.shape == (B, 1)

    tol = 3e-2 if gen >= 6 else 2e-3
    assert jnp.allclose(values, v_network_ref_mirror(obs, params, act_dtype),
                        atol=tol, rtol=tol), "mismatch vs kernel-numerics reference"
    assert jnp.allclose(values, v_network_ref_f32(obs, params),
                        atol=6e-2, rtol=6e-2), "mismatch vs f32 reference"

    # Ragged batch (not a multiple of 128) with the auto-derived tile — relies
    # on Pallas edge-block masking instead of any wrapper-side padding.
    B2 = 200
    obs2 = jax.random.normal(k_obs, (B2, obs_dim), jnp.float32)
    values2 = jax.block_until_ready(v_network_forward(obs2, params))
    assert values2.shape == (B2, 1)
    assert jnp.allclose(values2, v_network_ref_f32(obs2, params),
                        atol=6e-2, rtol=6e-2), "ragged-batch mismatch vs f32 reference"

    print("KERNEL_OK")
</pallas_src>

<mosaic_0001>
module attributes {stable_mosaic.version = 11 : i64} {
  func.func @_vnet_kernel(%arg0: i32, %arg1: memref<128x16xf32, #tpu.memory_space<vmem>>, %arg2: memref<64x16xf32, #tpu.memory_space<vmem>>, %arg3: memref<64x1xf32, #tpu.memory_space<vmem>>, %arg4: memref<64x64xf32, #tpu.memory_space<vmem>>, %arg5: memref<64x1xf32, #tpu.memory_space<vmem>>, %arg6: memref<64x1xf32, #tpu.memory_space<vmem>>, %arg7: memref<1xf32, #tpu.memory_space<smem>>, %arg8: memref<1x128xf32, #tpu.memory_space<vmem>>) attributes {dimension_semantics = [#tpu.dimension_semantics<parallel>], iteration_bounds = array<i64: 3>, scalar_prefetch = 0 : i64, scratch_operands = 0 : i64, tpu.core_type = #tpu.core_type<tc>, window_params = [{transform_indices = @transform_0, window_bounds = array<i64: 128, 16>}, {pipeline_mode = #tpu.pipeline_mode<synchronous>, transform_indices = @transform_1, window_bounds = array<i64: 64, 16>}, {pipeline_mode = #tpu.pipeline_mode<synchronous>, transform_indices = @transform_2, window_bounds = array<i64: 64, 1>}, {pipeline_mode = #tpu.pipeline_mode<synchronous>, transform_indices = @transform_3, window_bounds = array<i64: 64, 64>}, {pipeline_mode = #tpu.pipeline_mode<synchronous>, transform_indices = @transform_4, window_bounds = array<i64: 64, 1>}, {pipeline_mode = #tpu.pipeline_mode<synchronous>, transform_indices = @transform_5, window_bounds = array<i64: 64, 1>}, {transform_indices = @transform_6, window_bounds = array<i64: 1>}, {transform_indices = @transform_7, window_bounds = array<i64: 1, 128>}]} {
    %c0 = arith.constant 0 : index
    %c0_0 = arith.constant 0 : index
    %0 = vector.load %arg1[%c0, %c0_0] : memref<128x16xf32, #tpu.memory_space<vmem>>, vector<128x16xf32>
    %1 = tpu.transpose %0, [1, 0] : vector<128x16xf32> -> vector<16x128xf32>
    %c0_1 = arith.constant 0 : index
    %c0_2 = arith.constant 0 : index
    %2 = vector.load %arg2[%c0_1, %c0_2] : memref<64x16xf32, #tpu.memory_space<vmem>>, vector<64x16xf32>
    %cst = arith.constant dense<0.000000e+00> : vector<64x128xf32>
    %3 = tpu.matmul %2, %1, %cst {dimension_numbers = #tpu.dot_dimension_numbers<[1], [0], [0], [1], [0, 0, 1, 1], [], []>} : vector<64x16xf32>, vector<16x128xf32>, vector<64x128xf32> -> vector<64x128xf32>
    %c0_3 = arith.constant 0 : index
    %c0_4 = arith.constant 0 : index
    %4 = vector.load %arg3[%c0_3, %c0_4] : memref<64x1xf32, #tpu.memory_space<vmem>>, vector<64x1xf32>
    %5 = vector.broadcast %4 : vector<64x1xf32> to vector<64x128xf32>
    %6 = arith.addf %3, %5 : vector<64x128xf32>
    %7 = math.tanh %6 : vector<64x128xf32>
    %c0_5 = arith.constant 0 : index
    %c0_6 = arith.constant 0 : index
    %8 = vector.load %arg4[%c0_5, %c0_6] : memref<64x64xf32, #tpu.memory_space<vmem>>, vector<64x64xf32>
    %cst_7 = arith.constant dense<0.000000e+00> : vector<64x128xf32>
    %9 = tpu.matmul %8, %7, %cst_7 {dimension_numbers = #tpu.dot_dimension_numbers<[1], [0], [0], [1], [0, 0, 1, 1], [], []>} : vector<64x64xf32>, vector<64x128xf32>, vector<64x128xf32> -> vector<64x128xf32>
    %c0_8 = arith.constant 0 : index
    %c0_9 = arith.constant 0 : index
    %10 = vector.load %arg5[%c0_8, %c0_9] : memref<64x1xf32, #tpu.memory_space<vmem>>, vector<64x1xf32>
    %11 = vector.broadcast %10 : vector<64x1xf32> to vector<64x128xf32>
    %12 = arith.addf %9, %11 : vector<64x128xf32>
    %13 = math.tanh %12 : vector<64x128xf32>
    %c0_10 = arith.constant 0 : index
    %c0_11 = arith.constant 0 : index
    %14 = vector.load %arg6[%c0_10, %c0_11] : memref<64x1xf32, #tpu.memory_space<vmem>>, vector<64x1xf32>
    %15 = vector.broadcast %14 : vector<64x1xf32> to vector<64x128xf32>
    %16 = arith.mulf %15, %13 : vector<64x128xf32>
    %cst_12 = arith.constant dense<0.000000e+00> : vector<128xf32>
    %17 = vector.multi_reduction <add>, %16, %cst_12 [0] : vector<64x128xf32> to vector<128xf32>
    %18 = vector.shape_cast %17 : vector<128xf32> to vector<1x128xf32>
    %c0_13 = arith.constant 0 : index
    %19 = memref.load %arg7[%c0_13] : memref<1xf32, #tpu.memory_space<smem>>
    %20 = vector.broadcast %19 : f32 to vector<1x128xf32>
    %21 = arith.addf %18, %20 : vector<1x128xf32>
    %c0_14 = arith.constant 0 : index
    %c0_15 = arith.constant 0 : index
    %22 = vector.load %arg8[%c0_14, %c0_15] : memref<1x128xf32, #tpu.memory_space<vmem>>, vector<1x128xf32>
    tpu.vector_store %arg8[%c0_14, %c0_15], %21 {strides = array<i32>} : memref<1x128xf32, #tpu.memory_space<vmem>>, vector<1x128xf32>,
    return
  }
  func.func @transform_0(%arg0: i32) -> (i32, i32) {
    %c0_i32 = arith.constant 0 : i32
    %c0_i32_0 = arith.constant 0 : i32
    return %arg0, %c0_i32 : i32, i32
  }
  func.func @transform_1(%arg0: i32) -> (i32, i32) {
    %c0_i32 = arith.constant 0 : i32
    %c0_i32_0 = arith.constant 0 : i32
    %c0_i32_1 = arith.constant 0 : i32
    return %c0_i32, %c0_i32_0 : i32, i32
  }
  func.func @transform_2(%arg0: i32) -> (i32, i32) {
    %c0_i32 = arith.constant 0 : i32
    %c0_i32_0 = arith.constant 0 : i32
    %c0_i32_1 = arith.constant 0 : i32
    return %c0_i32, %c0_i32_0 : i32, i32
  }
  func.func @transform_3(%arg0: i32) -> (i32, i32) {
    %c0_i32 = arith.constant 0 : i32
    %c0_i32_0 = arith.constant 0 : i32
    %c0_i32_1 = arith.constant 0 : i32
    return %c0_i32, %c0_i32_0 : i32, i32
  }
  func.func @transform_4(%arg0: i32) -> (i32, i32) {
    %c0_i32 = arith.constant 0 : i32
    %c0_i32_0 = arith.constant 0 : i32
    %c0_i32_1 = arith.constant 0 : i32
    return %c0_i32, %c0_i32_0 : i32, i32
  }
  func.func @transform_5(%arg0: i32) -> (i32, i32) {
    %c0_i32 = arith.constant 0 : i32
    %c0_i32_0 = arith.constant 0 : i32
    %c0_i32_1 = arith.constant 0 : i32
    return %c0_i32, %c0_i32_0 : i32, i32
  }
  func.func @transform_6(%arg0: i32) -> i32 {
    %c0_i32 = arith.constant 0 : i32
    %c0_i32_0 = arith.constant 0 : i32
    return %c0_i32 : i32
  }
  func.func @transform_7(%arg0: i32) -> (i32, i32) {
    %c0_i32 = arith.constant 0 : i32
    %c0_i32_0 = arith.constant 0 : i32
    return %c0_i32, %arg0 : i32, i32
  }
}

</mosaic_0001>

<llo_original>
// kernel: tpu_custom_call.1
$region0: #{tpu_custom_call.1}
  #allocation0 [shape = 'u32[]', space=smem, size = 0x4, offset = 0x4, fixed_abs, tag = 'smem constant byte address 0x4 - core index']
  #allocation1 [shape = 'u32[144,128]{1,0:T(1,128)}', space=vmem, size = 0x12000, scoped, tag = 'internal scratch']
  #allocation2 [shape = 'f32[1]{0:T(128)S(6)}', space=smem, size = 0x200, scoped, tag = 'scoped memory for tpu_custom_call.1']
  %s0 = inlined_call_operand.vmem [shape: f32[384,16], index: 0, kind: input, shape index: {}]
  %s1 = inlined_call_operand.vmem [shape: f32[64,16], index: 1, kind: input, shape index: {}]
  %s2 = inlined_call_operand.vmem [shape: f32[64,1], index: 2, kind: input, shape index: {}]
  %s3 = inlined_call_operand.vmem [shape: f32[64,64], index: 3, kind: input, shape index: {}]
  %s4 = inlined_call_operand.vmem [shape: f32[64,1], index: 4, kind: input, shape index: {}]
  %s5 = inlined_call_operand.vmem [shape: f32[64,1], index: 5, kind: input, shape index: {}]
  %s6 = inlined_call_operand.<no memory space> [shape: f32[1], index: 6, kind: input, shape index: {}]
  %s7 = inlined_call_operand.hbm [shape: f32[1,384], index: 7, kind: output, shape index: {}]
  %s8 = sld [smem:[#allocation0]]
  $region61: #{tpu_custom_call.1} parent=0
    _
  %s10 = ssub.s32 1, %s8
  %s11 = scalar_select 0, %s10, %s8
  %12 = sst [smem:[#allocation2]] %s6
  $region1: #{tpu_custom_call.1} parent=0
    #allocation3 [shape = 'u8[1024]{0}', space=vmem, size = 0x400, scoped, tag = 'output window, operand 0']
    #allocation4 [shape = 's32[2]{0}', space=sflag, size = 0x8, scoped, tag = 'scoped memory for tpu_custom_call.1']
    %13 = vsyncpa [#allocation4], 0
    %s14 = scalar_lea.sflag [#allocation4], 1
    %15 = vsyncpa %s14, 0
    loop: start=0, step=1, limit=5
    $region2: #{tpu_custom_call.1} parent=1 // loop_pre_header
      _
    $region3: #{tpu_custom_call.1} parent=1 // loop_header
      %s17 = sphi 0, %s21
      %p18 = scmp.ge.s32.totalorder %s17, 5
      %s27 = sphi 0, %s29
      %s30 = sphi 0, %s27
      %s31 = sphi 0, %s30
      %s47 = sphi 0, %s31
      %s51 = sphi 0, %s51
      %s53 = sphi 0, %s51
      %s54 = sphi 0, %s53
      %s68 = sphi 0, %s54
      %s72 = sphi 0, %s72
      %s74 = sphi 0, %s72
      %s75 = sphi 0, %s74
      %s89 = sphi 0, %s75
      %s93 = sphi 0, %s93
      %s95 = sphi 0, %s93
      %s96 = sphi 0, %s95
      %s110 = sphi 0, %s96
      %s114 = sphi 0, %s114
      %s116 = sphi 0, %s114
      %s117 = sphi 0, %s116
      %s131 = sphi 0, %s117
      %s135 = sphi 0, %s135
      %s137 = sphi 0, %s135
      %s138 = sphi 0, %s137
      %s152 = sphi 0, %s138
      %s156 = sphi 0, %s156
      %s158 = sphi 0, %s156
      %s159 = sphi 0, %s158
      %s173 = sphi 0, %s159
      %s179 = sphi 0, %s181
      %s182 = sphi 0, %s179
      %s183 = sphi 0, %s182
      %s199 = sphi 0, %s183
    $region4: #{tpu_custom_call.1} parent=1 // loop_header_branch
      %20 = sbr.rel (%p18) target = $region8
    $region5: #{tpu_custom_call.1} parent=1 // loop_body
      %s22 = ssub.s32 %s17, 1
      %s23 = ssub.s32 %s17, 2
      %s24 = sadd.s32 %s17, 1
      %s25 = ssub.s32 %s17, %s24
      %p26 = scmp.eq.s32.totalorder %s25, 0
      %s28 = sadd.s32 %s27, 1
      %s29 = scalar_select %p26, %s27, %s28
      %p32 = pneg %p26
      %p33 = scmp.eq.s32.totalorder %s17, 2
      %p34 = por %p32, %p33
      %p35 = scmp.ne.s32.totalorder %s27, %s30
      %p36 = scmp.eq.s32.totalorder %s17, 0
      %p37 = por %p35, %p36
      %p38 = scmp.ne.s32.totalorder %s27, %s30
      %p39 = scmp.eq.s32.totalorder %s22, 2
      %p40 = por %p38, %p39
      %p41 = scmp.ne.s32.totalorder %s30, %s31
      %p42 = scmp.eq.s32.totalorder %s22, 0
      %p43 = por %p41, %p42
      %p44 = scmp.ne.s32.totalorder %s30, %s31
      %p45 = scmp.eq.s32.totalorder %s23, 2
      %p46 = por %p44, %p45
      %p48 = scmp.ne.s32.totalorder %s31, %s47
      %p49 = scmp.eq.s32.totalorder %s23, 0
      %p50 = por %p48, %p49
      %s52 = sadd.s32 %s51, 1
      %p55 = scmp.eq.s32.totalorder %s17, 2
      %p56 = scmp.ne.s32.totalorder %s51, %s53
      %p57 = scmp.eq.s32.totalorder %s17, 0
      %p58 = por %p56, %p57
      %p59 = scmp.ne.s32.totalorder %s51, %s53
      %p60 = scmp.eq.s32.totalorder %s22, 2
      %p61 = por %p59, %p60
      %p62 = scmp.ne.s32.totalorder %s53, %s54
      %p63 = scmp.eq.s32.totalorder %s22, 0
      %p64 = por %p62, %p63
      %p65 = scmp.ne.s32.totalorder %s53, %s54
      %p66 = scmp.eq.s32.totalorder %s23, 2
      %p67 = por %p65, %p66
      %p69 = scmp.ne.s32.totalorder %s54, %s68
      %p70 = scmp.eq.s32.totalorder %s23, 0
      %p71 = por %p69, %p70
      %s73 = sadd.s32 %s72, 1
      %p76 = scmp.eq.s32.totalorder %s17, 2
      %p77 = scmp.ne.s32.totalorder %s72, %s74
      %p78 = scmp.eq.s32.totalorder %s17, 0
      %p79 = por %p77, %p78
      %p80 = scmp.ne.s32.totalorder %s72, %s74
      %p81 = scmp.eq.s32.totalorder %s22, 2
      %p82 = por %p80, %p81
      %p83 = scmp.ne.s32.totalorder %s74, %s75
      %p84 = scmp.eq.s32.totalorder %s22, 0
      %p85 = por %p83, %p84
      %p86 = scmp.ne.s32.totalorder %s74, %s75
      %p87 = scmp.eq.s32.totalorder %s23, 2
      %p88 = por %p86, %p87
      %p90 = scmp.ne.s32.totalorder %s75, %s89
      %p91 = scmp.eq.s32.totalorder %s23, 0
      %p92 = por %p90, %p91
      %s94 = sadd.s32 %s93, 1
      %p97 = scmp.eq.s32.totalorder %s17, 2
      %p98 = scmp.ne.s32.totalorder %s93, %s95
      %p99 = scmp.eq.s32.totalorder %s17, 0
      %p100 = por %p98, %p99
      %p101 = scmp.ne.s32.totalorder %s93, %s95
      %p102 = scmp.eq.s32.totalorder %s22, 2
      %p103 = por %p101, %p102
      %p104 = scmp.ne.s32.totalorder %s95, %s96
      %p105 = scmp.eq.s32.totalorder %s22, 0
      %p106 = por %p104, %p105
      %p107 = scmp.ne.s32.totalorder %s95, %s96
      %p108 = scmp.eq.s32.totalorder %s23, 2
      %p109 = por %p107, %p108
      %p111 = scmp.ne.s32.totalorder %s96, %s110
      %p112 = scmp.eq.s32.totalorder %s23, 0
      %p113 = por %p111, %p112
      %s115 = sadd.s32 %s114, 1
      %p118 = scmp.eq.s32.totalorder %s17, 2
      %p119 = scmp.ne.s32.totalorder %s114, %s116
      %p120 = scmp.eq.s32.totalorder %s17, 0
      %p121 = por %p119, %p120
      %p122 = scmp.ne.s32.totalorder %s114, %s116
      %p123 = scmp.eq.s32.totalorder %s22, 2
      %p124 = por %p122, %p123
      %p125 = scmp.ne.s32.totalorder %s116, %s117
      %p126 = scmp.eq.s32.totalorder %s22, 0
      %p127 = por %p125, %p126
      %p128 = scmp.ne.s32.totalorder %s116, %s117
      %p129 = scmp.eq.s32.totalorder %s23, 2
      %p130 = por %p128, %p129
      %p132 = scmp.ne.s32.totalorder %s117, %s131
      %p133 = scmp.eq.s32.totalorder %s23, 0
      %p134 = por %p132, %p133
      %s136 = sadd.s32 %s135, 1
      %p139 = scmp.eq.s32.totalorder %s17, 2
      %p140 = scmp.ne.s32.totalorder %s135, %s137
      %p141 = scmp.eq.s32.totalorder %s17, 0
      %p142 = por %p140, %p141
      %p143 = scmp.ne.s32.totalorder %s135, %s137
      %p144 = scmp.eq.s32.totalorder %s22, 2
      %p145 = por %p143, %p144
      %p146 = scmp.ne.s32.totalorder %s137, %s138
      %p147 = scmp.eq.s32.totalorder %s22, 0
      %p148 = por %p146, %p147
      %p149 = scmp.ne.s32.totalorder %s137, %s138
      %p150 = scmp.eq.s32.totalorder %s23, 2
      %p151 = por %p149, %p150
      %p153 = scmp.ne.s32.totalorder %s138, %s152
      %p154 = scmp.eq.s32.totalorder %s23, 0
      %p155 = por %p153, %p154
      %s157 = sadd.s32 %s156, 1
      %p160 = scmp.eq.s32.totalorder %s17, 2
      %p161 = scmp.ne.s32.totalorder %s156, %s158
      %p162 = scmp.eq.s32.totalorder %s17, 0
      %p163 = por %p161, %p162
      %p164 = scmp.ne.s32.totalorder %s156, %s158
      %p165 = scmp.eq.s32.totalorder %s22, 2
      %p166 = por %p164, %p165
      %p167 = scmp.ne.s32.totalorder %s158, %s159
      %p168 = scmp.eq.s32.totalorder %s22, 0
      %p169 = por %p167, %p168
      %p170 = scmp.ne.s32.totalorder %s158, %s159
      %p171 = scmp.eq.s32.totalorder %s23, 2
      %p172 = por %p170, %p171
      %p174 = scmp.ne.s32.totalorder %s159, %s173
      %p175 = scmp.eq.s32.totalorder %s23, 0
      %p176 = por %p174, %p175
      %s177 = ssub.s32 %s17, %s24
      %p178 = scmp.eq.s32.totalorder %s177, 0
      %s180 = sadd.s32 %s179, 1
      %s181 = scalar_select %p178, %s179, %s180
      %p184 = pneg %p178
      %p185 = scmp.eq.s32.totalorder %s17, 2
      %p186 = por %p184, %p185
      %p187 = scmp.ne.s32.totalorder %s179, %s182
      %p188 = scmp.eq.s32.totalorder %s17, 0
      %p189 = por %p187, %p188
      %p190 = scmp.ne.s32.totalorder %s179, %s182
      %p191 = scmp.eq.s32.totalorder %s22, 2
      %p192 = por %p190, %p191
      %p193 = scmp.ne.s32.totalorder %s182, %s183
      %p194 = scmp.eq.s32.totalorder %s22, 0
      %p195 = por %p193, %p194
      %p196 = scmp.ne.s32.totalorder %s182, %s183
      %p197 = scmp.eq.s32.totalorder %s23, 2
      %p198 = por %p196, %p197
      %p200 = scmp.ne.s32.totalorder %s183, %s199
      %p201 = scmp.eq.s32.totalorder %s23, 0
      %p202 = por %p200, %p201
      %p203 = scmp.le.s32.totalorder 1, %s17
      %p204 = scmp.lt.s32.totalorder %s17, 4
      %p205 = pnand %p203, %p204
      %p206 = pneg %p205
      // Predicated region
      $region9: #{tpu_custom_call.1} parent=5 // pred_check
        _
      $region10: #{tpu_custom_call.1} parent=5 // pred_check_branch
        %208 = sbr.rel (%p205) target = $region12
      $region11: #{tpu_custom_call.1} parent=5 // pred_region
        %s209 = ssub.s32 %s17, 1
        // Predicated region
        $region13: #{tpu_custom_call.1} parent=11 // pred_check
          %p210 = pneg %p64
        $region14: #{tpu_custom_call.1} parent=11 // pred_check_branch
          %212 = sbr.rel (%p210) target = $region16
        $region15: #{tpu_custom_call.1} parent=11 // pred_region
          _
        $region16: #{tpu_custom_call.1} parent=11 // pred_fallthru
          _
        // Predicated region
        $region17: #{tpu_custom_call.1} parent=11 // pred_check
          %p213 = pneg %p85
        $region18: #{tpu_custom_call.1} parent=11 // pred_check_branch
          %215 = sbr.rel (%p213) target = $region20
        $region19: #{tpu_custom_call.1} parent=11 // pred_region
          _
        $region20: #{tpu_custom_call.1} parent=11 // pred_fallthru
          _
        // Predicated region
        $region21: #{tpu_custom_call.1} parent=11 // pred_check
          %p216 = pneg %p106
        $region22: #{tpu_custom_call.1} parent=11 // pred_check_branch
          %218 = sbr.rel (%p216) target = $region24
        $region23: #{tpu_custom_call.1} parent=11 // pred_region
          _
        $region24: #{tpu_custom_call.1} parent=11 // pred_fallthru
          _
        // Predicated region
        $region25: #{tpu_custom_call.1} parent=11 // pred_check
          %p219 = pneg %p127
        $region26: #{tpu_custom_call.1} parent=11 // pred_check_branch
          %221 = sbr.rel (%p219) target = $region28
        $region27: #{tpu_custom_call.1} parent=11 // pred_region
          _
        $region28: #{tpu_custom_call.1} parent=11 // pred_fallthru
          _
        // Predicated region
        $region29: #{tpu_custom_call.1} parent=11 // pred_check
          %p222 = pneg %p148
        $region30: #{tpu_custom_call.1} parent=11 // pred_check_branch
          %224 = sbr.rel (%p222) target = $region32
        $region31: #{tpu_custom_call.1} parent=11 // pred_region
          _
        $region32: #{tpu_custom_call.1} parent=11 // pred_fallthru
          _
        // Predicated region
        $region33: #{tpu_custom_call.1} parent=11 // pred_check
          %p225 = pneg %p169
        $region34: #{tpu_custom_call.1} parent=11 // pred_check_branch
          %227 = sbr.rel (%p225) target = $region36
        $region35: #{tpu_custom_call.1} parent=11 // pred_region
          _
        $region36: #{tpu_custom_call.1} parent=11 // pred_fallthru
          _
      $region12: #{tpu_custom_call.1} parent=5 // pred_fallthru
        _
      %p228 = scmp.lt.s32.totalorder %s17, 3
      // Predicated region
      $region37: #{tpu_custom_call.1} parent=5 // pred_check
        %p229 = pneg %p228
      $region38: #{tpu_custom_call.1} parent=5 // pred_check_branch
        %231 = sbr.rel (%p229) target = $region40
      $region39: #{tpu_custom_call.1} parent=5 // pred_region
        // Predicated region
        $region41: #{tpu_custom_call.1} parent=39 // pred_check
          %p232 = pneg %p37
        $region42: #{tpu_custom_call.1} parent=39 // pred_check_branch
          %234 = sbr.rel (%p232) target = $region44
        $region43: #{tpu_custom_call.1} parent=39 // pred_region
          %s235 = smul.u32 16, %s17
          %p236 = scmp.lt.s32.totalorder %s235, 47
          %s237 = scalar_select %p236, %s235, 47
          %s238 = smul.addr %s237, 8
          %s239 = scalar_lea.vmem %s0, %s238
          %s240 = smul.u32 16, %s17
        $region44: #{tpu_custom_call.1} parent=39 // pred_fallthru
          _
      $region40: #{tpu_custom_call.1} parent=5 // pred_fallthru
        _
      %p241 = scmp.le.s32.totalorder 1, %s17
      %p242 = scmp.lt.s32.totalorder %s17, 4
      %p243 = pnand %p241, %p242
      %p244 = pneg %p243
      // Predicated region
      $region45: #{tpu_custom_call.1} parent=5 // pred_check
        _
      $region46: #{tpu_custom_call.1} parent=5 // pred_check_branch
        %246 = sbr.rel (%p243) target = $region48
      $region47: #{tpu_custom_call.1} parent=5 // pred_region
        %s247 = ssub.s32 %s17, 1
        %s248 = smul.u32 16, %s22
        %p249 = scmp.lt.s32.totalorder %s248, 47
        %s250 = scalar_select %p249, %s248, 47
        %s251 = smul.addr %s250, 8
        %s252 = scalar_lea.vmem %s0, %s251
        %p253 = pneg %p43
        %p254 = pneg %p40
        %p255 = pneg %p64
        %p256 = pneg %p61
        %p257 = pneg %p85
        %p258 = pneg %p82
        %p259 = pneg %p106
        %p260 = pneg %p103
        %p261 = pneg %p127
        %p262 = pneg %p124
        %p263 = pneg %p148
        %p264 = pneg %p145
        %p265 = pneg %p169
        %p266 = pneg %p166
        %p267 = pneg %p195
        %p268 = pneg %p192
        %s269 = sand.u32 %s182, 1
        %s270 = scalar_lea.sflag [#allocation4], %s269
        %s271 = sand.u32 %s182, 1
        %s272 = scalar_lea.vmem [#allocation3], %s271
        %s273 = smul.u32 16, %s22
        %p274 = scmp.lt.s32.totalorder %s273, 47
        %s275 = scalar_select %p274, %s273, 47
        %s276 = smul.addr %s275, 8
        %s277 = scalar_lea.vmem %s0, %s276
        %s278 = smul.u32 16, %s22
        %v279 = vld [vmem:[%s277] sm:$0xff]
        %v280 = vld [vmem:[%s277 + $0x8] sm:$0xff]
        %v281 = vld [vmem:[%s277 + $0x10] sm:$0xff]
        %v282 = vld [vmem:[%s277 + $0x18] sm:$0xff]
        %v283 = vld [vmem:[%s277 + $0x20] sm:$0xff]
        %v284 = vld [vmem:[%s277 + $0x28] sm:$0xff]
        %v285 = vld [vmem:[%s277 + $0x30] sm:$0xff]
        %v286 = vld [vmem:[%s277 + $0x38] sm:$0xff]
        %v287 = vld [vmem:[%s277 + $0x40] sm:$0xff]
        %v288 = vld [vmem:[%s277 + $0x48] sm:$0xff]
        %v289 = vld [vmem:[%s277 + $0x50] sm:$0xff]
        %v290 = vld [vmem:[%s277 + $0x58] sm:$0xff]
        %v291 = vld [vmem:[%s277 + $0x60] sm:$0xff]
        %v292 = vld [vmem:[%s277 + $0x68] sm:$0xff]
        %v293 = vld [vmem:[%s277 + $0x70] sm:$0xff]
        %v294 = vld [vmem:[%s277 + $0x78] sm:$0xff]
        %v295 = vld [vmem:[%s1] sm:$0xff]
        %v296 = vld [vmem:[%s1 + $0x8] sm:$0xff]
        %v297 = vld [vmem:[%s1 + $0x10] sm:$0xff]
        %v298 = vld [vmem:[%s1 + $0x18] sm:$0xff]
        %v299 = vld [vmem:[%s1 + $0x20] sm:$0xff]
        %v300 = vld [vmem:[%s1 + $0x28] sm:$0xff]
        %v301 = vld [vmem:[%s1 + $0x30] sm:$0xff]
        %v302 = vld [vmem:[%s1 + $0x38] sm:$0xff]
        %v303 = vld [vmem:[%s2] sm:$0xff]
        %v304 = vld [vmem:[%s2 + $0x8] sm:$0xff]
        %v305 = vld [vmem:[%s2 + $0x10] sm:$0xff]
        %v306 = vld [vmem:[%s2 + $0x18] sm:$0xff]
        %v307 = vld [vmem:[%s2 + $0x20] sm:$0xff]
        %v308 = vld [vmem:[%s2 + $0x28] sm:$0xff]
        %v309 = vld [vmem:[%s2 + $0x30] sm:$0xff]
        %v310 = vld [vmem:[%s2 + $0x38] sm:$0xff]
        %312 = vset.pattern.permute.xlu0 0
        %313 = vperm.xlu0 %312, %v303
        %v314 = vpop.permute.xlu0 %313
        %317 = vset.pattern.permute.xlu0 0
        %318 = vperm.xlu0 %317, %v304
        %v319 = vpop.permute.xlu0 %318
        %322 = vset.pattern.permute.xlu0 0
        %323 = vperm.xlu0 %322, %v305
        %v324 = vpop.permute.xlu0 %323
        %327 = vset.pattern.permute.xlu0 0
        %328 = vperm.xlu0 %327, %v306
        %v329 = vpop.permute.xlu0 %328
        %332 = vset.pattern.permute.xlu0 0
        %333 = vperm.xlu0 %332, %v307
        %v334 = vpop.permute.xlu0 %333
        %337 = vset.pattern.permute.xlu0 0
        %338 = vperm.xlu0 %337, %v308
        %v339 = vpop.permute.xlu0 %338
        %342 = vset.pattern.permute.xlu0 0
        %343 = vperm.xlu0 %342, %v309
        %v344 = vpop.permute.xlu0 %343
        %347 = vset.pattern.permute.xlu0 0
        %348 = vperm.xlu0 %347, %v310
        %v349 = vpop.permute.xlu0 %348
        %vm351 = vcmask 130048
        %v353 = vsel %vm351, %v295, 0
        %v356 = vsel %vm351, %v296, 0
        %v359 = vsel %vm351, %v297, 0
        %v362 = vsel %vm351, %v298, 0
        %v365 = vsel %vm351, %v299, 0
        %v368 = vsel %vm351, %v300, 0
        %v371 = vsel %vm351, %v301, 0
        %v374 = vsel %vm351, %v302, 0
        %v377 = vsel %vm351, %v279, 0
        %v380 = vsel %vm351, %v280, 0
        %v383 = vsel %vm351, %v281, 0
        %v386 = vsel %vm351, %v282, 0
        %v389 = vsel %vm351, %v283, 0
        %v392 = vsel %vm351, %v284, 0
        %v395 = vsel %vm351, %v285, 0
        %v398 = vsel %vm351, %v286, 0
        %v401 = vsel %vm351, %v287, 0
        %v404 = vsel %vm351, %v288, 0
        %v407 = vsel %vm351, %v289, 0
        %v410 = vsel %vm351, %v290, 0
        %v413 = vsel %vm351, %v291, 0
        %v416 = vsel %vm351, %v292, 0
        %v419 = vsel %vm351, %v293, 0
        %v422 = vsel %vm351, %v294, 0
        %424 = vmatprep.subr.mxu0 0.0
        %425 = vmatpush1.xpose.msra.mxu0 %v377
        %426 = vmatprep.subr.mxu0 0.0
        %427 = vmatpush1.xpose.msra.mxu0 %v380
        %428 = vmatprep.subr.mxu0 0.0
        %429 = vmatpush1.xpose.msra.mxu0 %v383
        %430 = vmatprep.subr.mxu0 0.0
        %431 = vmatpush1.xpose.msra.mxu0 %v386
        %432 = vmatprep.subr.mxu0 0.0
        %433 = vmatpush1.xpose.msra.mxu0 %v389
        %434 = vmatprep.subr.mxu0 0.0
        %435 = vmatpush1.xpose.msra.mxu0 %v392
        %436 = vmatprep.subr.mxu0 0.0
        %437 = vmatpush1.xpose.msra.mxu0 %v395
        %438 = vmatprep.subr.mxu0 0.0
        %439 = vmatpush1.xpose.msra.mxu0 %v398
        %440 = vmatprep.subr.mxu0 0.0
        %441 = vmatpush1.xpose.msra.mxu0 %v401
        %442 = vmatprep.subr.mxu0 0.0
        %443 = vmatpush1.xpose.msra.mxu0 %v404
        %444 = vmatprep.subr.mxu0 0.0
        %445 = vmatpush1.xpose.msra.mxu0 %v407
        %446 = vmatprep.subr.mxu0 0.0
        %447 = vmatpush1.xpose.msra.mxu0 %v410
        %448 = vmatprep.subr.mxu0 0.0
        %449 = vmatpush1.xpose.msra.mxu0 %v413
        %450 = vmatprep.subr.mxu0 0.0
        %451 = vmatpush1.xpose.msra.mxu0 %v416
        %452 = vmatprep.subr.mxu0 0.0
        %453 = vmatpush1.xpose.msra.mxu0 %v419
        %454 = vmatprep.subr.mxu0 0.0
        %455 = vmatpush1.xpose.msra.mxu0 %v422
        %456 = vmatprep.subr.mxu0 0.0
        %457 = vmatpush1.xpose.msra.mxu0 0.0
        %458 = vmatprep.subr.mxu0 0.0
        %459 = vmatpush1.xpose.msra.mxu0 0.0
        %460 = vmatprep.subr.mxu0 0.0
        %461 = vmatpush1.xpose.msra.mxu0 0.0
        %462 = vmatprep.subr.mxu0 0.0
        %463 = vmatpush1.xpose.msra.mxu0 0.0
        %464 = vmatprep.subr.mxu0 0.0
        %465 = vmatpush1.xpose.msra.mxu0 0.0
        %466 = vmatprep.subr.mxu0 0.0
        %467 = vmatpush1.xpose.msra.mxu0 0.0
        %468 = vmatprep.subr.mxu0 0.0
        %469 = vmatpush1.xpose.msra.mxu0 0.0
        %470 = vmatprep.subr.mxu0 0.0
        %471 = vmatpush1.xpose.msra.mxu0 0.0
        %472 = vmatprep.subr.mxu0 0.0
        %473 = vmatpush1.xpose.msra.mxu0 0.0
        %474 = vmatprep.subr.mxu0 0.0
        %475 = vmatpush1.xpose.msra.mxu0 0.0
        %476 = vmatprep.subr.mxu0 0.0
        %477 = vmatpush1.xpose.msra.mxu0 0.0
        %478 = vmatprep.subr.mxu0 0.0
        %479 = vmatpush1.xpose.msra.mxu0 0.0
        %480 = vmatprep.subr.mxu0 0.0
        %481 = vmatpush1.xpose.msra.mxu0 0.0
        %482 = vmatprep.subr.mxu0 0.0
        %483 = vmatpush1.xpose.msra.mxu0 0.0
        %484 = vmatprep.subr.mxu0 0.0
        %485 = vmatpush1.xpose.msra.mxu0 0.0
        %486 = vmatprep.subr.mxu0 0.0
        %487 = vmatpush1.xpose.msra.mxu0 0.0
        %488 = vmatprep.mubr.f32.mxu0 0.0
        %489 = vmatmul.mubr.f32.gmra.mrb[0].mxu0 %v353
        %v490 = vpop.f32.mrb[0].mxu0
        %v491 = vadd.f32 %v314, %v490
        %v492 = vpop.f32.mrb[0].mxu0
        %493 = vmatprep.mubr.f32.mxu0 0.0
        %494 = vmatmul.mubr.f32.gmra.mrb[0].mxu0 %v356
        %v495 = vpop.f32.mrb[0].mxu0
        %v496 = vadd.f32 %v319, %v495
        %v497 = vpop.f32.mrb[0].mxu0
        %498 = vmatprep.mubr.f32.mxu0 0.0
        %499 = vmatmul.mubr.f32.gmra.mrb[0].mxu0 %v359
        %v500 = vpop.f32.mrb[0].mxu0
        %v501 = vadd.f32 %v324, %v500
        %v502 = vpop.f32.mrb[0].mxu0
        %503 = vmatprep.mubr.f32.mxu0 0.0
        %504 = vmatmul.mubr.f32.gmra.mrb[0].mxu0 %v362
        %v505 = vpop.f32.mrb[0].mxu0
        %v506 = vadd.f32 %v329, %v505
        %v507 = vpop.f32.mrb[0].mxu0
        %508 = vmatprep.mubr.f32.mxu0 0.0
        %509 = vmatmul.mubr.f32.gmra.mrb[0].mxu0 %v365
        %v510 = vpop.f32.mrb[0].mxu0
        %v511 = vadd.f32 %v334, %v510
        %v512 = vpop.f32.mrb[0].mxu0
        %513 = vmatprep.mubr.f32.mxu0 0.0
        %514 = vmatmul.mubr.f32.gmra.mrb[0].mxu0 %v368
        %v515 = vpop.f32.mrb[0].mxu0
        %v516 = vadd.f32 %v339, %v515
        %v517 = vpop.f32.mrb[0].mxu0
        %518 = vmatprep.mubr.f32.mxu0 0.0
        %519 = vmatmul.mubr.f32.gmra.mrb[0].mxu0 %v371
        %v520 = vpop.f32.mrb[0].mxu0
        %v521 = vadd.f32 %v344, %v520
        %v522 = vpop.f32.mrb[0].mxu0
        %523 = vmatprep.mubr.f32.mxu0 0.0
        %524 = vmatmul.mubr.f32.gmra.mrb[0].mxu0 %v374
        %v525 = vpop.f32.mrb[0].mxu0
        %v526 = vadd.f32 %v349, %v525
        %v527 = vpop.f32.mrb[0].mxu0
        %528 = vdwg.mxu0
        %v529 = vtanh.pop %v491
        %v530 = vtanh.pop %v496
        %v531 = vtanh.pop %v501
        %v532 = vtanh.pop %v506
        %v533 = vtanh.pop %v511
        %v534 = vtanh.pop %v516
        %v535 = vtanh.pop %v521
        %v536 = vtanh.pop %v526
        %v537 = vld [vmem:[%s3] sm:$0xff]
        %v538 = vld [vmem:[%s3 + $0x8] sm:$0xff]
        %v539 = vld [vmem:[%s3 + $0x10] sm:$0xff]
        %v540 = vld [vmem:[%s3 + $0x18] sm:$0xff]
        %v541 = vld [vmem:[%s3 + $0x20] sm:$0xff]
        %v542 = vld [vmem:[%s3 + $0x28] sm:$0xff]
        %v543 = vld [vmem:[%s3 + $0x30] sm:$0xff]
        %v544 = vld [vmem:[%s3 + $0x38] sm:$0xff]
        %v545 = vld [vmem:[%s4] sm:$0xff]
        %v546 = vld [vmem:[%s4 + $0x8] sm:$0xff]
        %v547 = vld [vmem:[%s4 + $0x10] sm:$0xff]
        %v548 = vld [vmem:[%s4 + $0x18] sm:$0xff]
        %v549 = vld [vmem:[%s4 + $0x20] sm:$0xff]
        %v550 = vld [vmem:[%s4 + $0x28] sm:$0xff]
        %v551 = vld [vmem:[%s4 + $0x30] sm:$0xff]
        %v552 = vld [vmem:[%s4 + $0x38] sm:$0xff]
        %554 = vset.pattern.permute.xlu0 0
        %555 = vperm.xlu0 %554, %v545
        %v556 = vpop.permute.xlu0 %555
        %559 = vset.pattern.permute.xlu0 0
        %560 = vperm.xlu0 %559, %v546
        %v561 = vpop.permute.xlu0 %560
        %564 = vset.pattern.permute.xlu0 0
        %565 = vperm.xlu0 %564, %v547
        %v566 = vpop.permute.xlu0 %565
        %569 = vset.pattern.permute.xlu0 0
        %570 = vperm.xlu0 %569, %v548
        %v571 = vpop.permute.xlu0 %570
        %574 = vset.pattern.permute.xlu0 0
        %575 = vperm.xlu0 %574, %v549
        %v576 = vpop.permute.xlu0 %575
        %579 = vset.pattern.permute.xlu0 0
        %580 = vperm.xlu0 %579, %v550
        %v581 = vpop.permute.xlu0 %580
        %584 = vset.pattern.permute.xlu0 0
        %585 = vperm.xlu0 %584, %v551
        %v586 = vpop.permute.xlu0 %585
        %589 = vset.pattern.permute.xlu0 0
        %590 = vperm.xlu0 %589, %v552
        %v591 = vpop.permute.xlu0 %590
        %vm593 = vcmask 523264
        %v595 = vsel %vm593, %v537, 0
        %v598 = vsel %vm593, %v538, 0
        %v601 = vsel %vm593, %v539, 0
        %v604 = vsel %vm593, %v540, 0
        %v607 = vsel %vm593, %v541, 0
        %v610 = vsel %vm593, %v542, 0
        %v613 = vsel %vm593, %v543, 0
        %v616 = vsel %vm593, %v544, 0
        %618 = vmatprep.subr.mxu0 0.0
        %619 = vmatpush1.msra.mxu0 %v529
        %620 = vmatprep.subr.mxu0 0.0
        %621 = vmatpush1.msra.mxu0 %v530
        %622 = vmatprep.subr.mxu0 0.0
        %623 = vmatpush1.msra.mxu0 %v531
        %624 = vmatprep.subr.mxu0 0.0
        %625 = vmatpush1.msra.mxu0 %v532
        %626 = vmatprep.subr.mxu0 0.0
        %627 = vmatpush1.msra.mxu0 %v533
        %628 = vmatprep.subr.mxu0 0.0
        %629 = vmatpush1.msra.mxu0 %v534
        %630 = vmatprep.subr.mxu0 0.0
        %631 = vmatpush1.msra.mxu0 %v535
        %632 = vmatprep.subr.mxu0 0.0
        %633 = vmatpush1.msra.mxu0 %v536
        %634 = vmatprep.subr.mxu0 0.0
        %635 = vmatpush1.msra.mxu0 0.0
        %636 = vmatprep.subr.mxu0 0.0
        %637 = vmatpush1.msra.mxu0 0.0
        %638 = vmatprep.subr.mxu0 0.0
        %639 = vmatpush1.msra.mxu0 0.0
        %640 = vmatprep.subr.mxu0 0.0
        %641 = vmatpush1.msra.mxu0 0.0
        %642 = vmatprep.subr.mxu0 0.0
        %643 = vmatpush1.msra.mxu0 0.0
        %644 = vmatprep.subr.mxu0 0.0
        %645 = vmatpush1.msra.mxu0 0.0
        %646 = vmatprep.subr.mxu0 0.0
        %647 = vmatpush1.msra.mxu0 0.0
        %648 = vmatprep.subr.mxu0 0.0
        %649 = vmatpush1.msra.mxu0 0.0
        %650 = vmatprep.subr.mxu0 0.0
        %651 = vmatpush1.msra.mxu0 0.0
        %652 = vmatprep.subr.mxu0 0.0
        %653 = vmatpush1.msra.mxu0 0.0
        %654 = vmatprep.subr.mxu0 0.0
        %655 = vmatpush1.msra.mxu0 0.0
        %656 = vmatprep.subr.mxu0 0.0
        %657 = vmatpush1.msra.mxu0 0.0
        %658 = vmatprep.subr.mxu0 0.0
        %659 = vmatpush1.msra.mxu0 0.0
        %660 = vmatprep.subr.mxu0 0.0
        %661 = vmatpush1.msra.mxu0 0.0
        %662 = vmatprep.subr.mxu0 0.0
        %663 = vmatpush1.msra.mxu0 0.0
        %664 = vmatprep.subr.mxu0 0.0
        %665 = vmatpush1.msra.mxu0 0.0
        %666 = vmatprep.subr.mxu0 0.0
        %667 = vmatpush1.msra.mxu0 0.0
        %668 = vmatprep.subr.mxu0 0.0
        %669 = vmatpush1.msra.mxu0 0.0
        %670 = vmatprep.subr.mxu0 0.0
        %671 = vmatpush1.msra.mxu0 0.0
        %672 = vmatprep.subr.mxu0 0.0
        %673 = vmatpush1.msra.mxu0 0.0
        %674 = vmatprep.subr.mxu0 0.0
        %675 = vmatpush1.msra.mxu0 0.0
        %676 = vmatprep.subr.mxu0 0.0
        %677 = vmatpush1.msra.mxu0 0.0
        %678 = vmatprep.subr.mxu0 0.0
        %679 = vmatpush1.msra.mxu0 0.0
        %680 = vmatprep.subr.mxu0 0.0
        %681 = vmatpush1.msra.mxu0 0.0
        %682 = vmatprep.mubr.f32.mxu0 0.0
        %683 = vmatmul.mubr.f32.gmra.mrb[0].mxu0 %v595
        %v684 = vpop.f32.mrb[0].mxu0
        %v685 = vadd.f32 %v556, %v684
        %v686 = vpop.f32.mrb[0].mxu0
        %687 = vmatprep.mubr.f32.mxu0 0.0
        %688 = vmatmul.mubr.f32.gmra.mrb[0].mxu0 %v598
        %v689 = vpop.f32.mrb[0].mxu0
        %v690 = vadd.f32 %v561, %v689
        %v691 = vpop.f32.mrb[0].mxu0
        %692 = vmatprep.mubr.f32.mxu0 0.0
        %693 = vmatmul.mubr.f32.gmra.mrb[0].mxu0 %v601
        %v694 = vpop.f32.mrb[0].mxu0
        %v695 = vadd.f32 %v566, %v694
        %v696 = vpop.f32.mrb[0].mxu0
        %697 = vmatprep.mubr.f32.mxu0 0.0
        %698 = vmatmul.mubr.f32.gmra.mrb[0].mxu0 %v604
        %v699 = vpop.f32.mrb[0].mxu0
        %v700 = vadd.f32 %v571, %v699
        %v701 = vpop.f32.mrb[0].mxu0
        %702 = vmatprep.mubr.f32.mxu0 0.0
        %703 = vmatmul.mubr.f32.gmra.mrb[0].mxu0 %v607
        %v704 = vpop.f32.mrb[0].mxu0
        %v705 = vadd.f32 %v576, %v704
        %v706 = vpop.f32.mrb[0].mxu0
        %707 = vmatprep.mubr.f32.mxu0 0.0
        %708 = vmatmul.mubr.f32.gmra.mrb[0].mxu0 %v610
        %v709 = vpop.f32.mrb[0].mxu0
        %v710 = vadd.f32 %v581, %v709
        %v711 = vpop.f32.mrb[0].mxu0
        %712 = vmatprep.mubr.f32.mxu0 0.0
        %713 = vmatmul.mubr.f32.gmra.mrb[0].mxu0 %v613
        %v714 = vpop.f32.mrb[0].mxu0
        %v715 = vadd.f32 %v586, %v714
        %v716 = vpop.f32.mrb[0].mxu0
        %717 = vmatprep.mubr.f32.mxu0 0.0
        %718 = vmatmul.mubr.f32.gmra.mrb[0].mxu0 %v616
        %v719 = vpop.f32.mrb[0].mxu0
        %v720 = vadd.f32 %v591, %v719
        %v721 = vpop.f32.mrb[0].mxu0
        %722 = vdwg.mxu0
        %v723 = vtanh.pop %v685
        %v724 = vtanh.pop %v690
        %v725 = vtanh.pop %v695
        %v726 = vtanh.pop %v700
        %v727 = vtanh.pop %v705
        %v728 = vtanh.pop %v710
        %v729 = vtanh.pop %v715
        %v730 = vtanh.pop %v720
        %v731 = vld [vmem:[%s5] sm:$0xff]
        %v732 = vld [vmem:[%s5 + $0x8] sm:$0xff]
        %v733 = vld [vmem:[%s5 + $0x10] sm:$0xff]
        %v734 = vld [vmem:[%s5 + $0x18] sm:$0xff]
        %v735 = vld [vmem:[%s5 + $0x20] sm:$0xff]
        %v736 = vld [vmem:[%s5 + $0x28] sm:$0xff]
        %v737 = vld [vmem:[%s5 + $0x30] sm:$0xff]
        %v738 = vld [vmem:[%s5 + $0x38] sm:$0xff]
        %740 = vset.pattern.permute.xlu0 0
        %741 = vperm.xlu0 %740, %v731
        %v742 = vpop.permute.xlu0 %741
        %745 = vset.pattern.permute.xlu0 0
        %746 = vperm.xlu0 %745, %v732
        %v747 = vpop.permute.xlu0 %746
        %750 = vset.pattern.permute.xlu0 0
        %751 = vperm.xlu0 %750, %v733
        %v752 = vpop.permute.xlu0 %751
        %755 = vset.pattern.permute.xlu0 0
        %756 = vperm.xlu0 %755, %v734
        %v757 = vpop.permute.xlu0 %756
        %760 = vset.pattern.permute.xlu0 0
        %761 = vperm.xlu0 %760, %v735
        %v762 = vpop.permute.xlu0 %761
        %765 = vset.pattern.permute.xlu0 0
        %766 = vperm.xlu0 %765, %v736
        %v767 = vpop.permute.xlu0 %766
        %770 = vset.pattern.permute.xlu0 0
        %771 = vperm.xlu0 %770, %v737
        %v772 = vpop.permute.xlu0 %771
        %775 = vset.pattern.permute.xlu0 0
        %776 = vperm.xlu0 %775, %v738
        %v777 = vpop.permute.xlu0 %776
        %v779 = vmul.f32 %v742, %v723
        %v780 = vmul.f32 %v747, %v724
        %v781 = vmul.f32 %v752, %v725
        %v782 = vmul.f32 %v757, %v726
        %v783 = vmul.f32 %v762, %v727
        %v784 = vmul.f32 %v767, %v728
        %v785 = vmul.f32 %v772, %v729
        %v786 = vmul.f32 %v777, %v730
        %v787 = vadd.f32 %v779, %v780
        %v788 = vadd.f32 %v787, %v781
        %v789 = vadd.f32 %v788, %v782
        %v790 = vadd.f32 %v789, %v783
        %v791 = vadd.f32 %v790, %v784
        %v792 = vadd.f32 %v791, %v785
        %v793 = vadd.f32 %v792, %v786
        %v794 = vrot.slane %v793, 4
        %v795 = vadd.f32 %v793, %v794
        %v796 = vrot.slane %v795, 2
        %v797 = vadd.f32 %v795, %v796
        %v798 = vrot.slane %v797, 1
        %v799 = vadd.f32 %v797, %v798
        %s800 = sld [smem:[#allocation2]]
        %v801 = vstv %s800
        %v802 = vadd.f32 %v799, %v801
        %803 = vst [vmem:[%s272] sm:$0x1] %v802
        %s804 = sand.u32 %s182, 1
        %s805 = scalar_lea.sflag [#allocation4], %s804
        %s806 = sand.u32 %s182, 1
        %s807 = scalar_lea.vmem [#allocation3], %s806
        // Predicated region
        $region49: #{tpu_custom_call.1} parent=47 // pred_check
          %p808 = pneg %p192
        $region50: #{tpu_custom_call.1} parent=47 // pred_check_branch
          %810 = sbr.rel (%p808) target = $region52
        $region51: #{tpu_custom_call.1} parent=47 // pred_region
          %s812 = ssub.s32 16, 16
          %813 = vsyncadd %s805, %s812
          %s814 = smul.addr %s22, 16
          %s815 = scalar_lea.hbm %s7, %s814
          %s817 = sshll.u32 %s807, 4
          %s818 = int_to_ptr.vmem [resolvable:$true] %s817
          %820 = dma.vmem_to_hbm [thread:$0]  %s818, 16, %s815, %s805
        $region52: #{tpu_custom_call.1} parent=47 // pred_fallthru
          _
      $region48: #{tpu_custom_call.1} parent=5 // pred_fallthru
        _
      %p821 = scmp.le.s32.totalorder 2, %s17
      // Predicated region
      $region53: #{tpu_custom_call.1} parent=5 // pred_check
        %p822 = pneg %p821
      $region54: #{tpu_custom_call.1} parent=5 // pred_check_branch
        %824 = sbr.rel (%p822) target = $region56
      $region55: #{tpu_custom_call.1} parent=5 // pred_region
        %s825 = ssub.s32 %s17, 2
        // Predicated region
        $region57: #{tpu_custom_call.1} parent=55 // pred_check
          %p826 = pneg %p198
        $region58: #{tpu_custom_call.1} parent=55 // pred_check_branch
          %828 = sbr.rel (%p826) target = $region60
        $region59: #{tpu_custom_call.1} parent=55 // pred_region
          %s829 = sand.u32 %s183, 1
          %s830 = scalar_lea.sflag [#allocation4], %s829
          %s831 = sand.u32 %s183, 1
          %s832 = scalar_lea.vmem [#allocation3], %s831
          %833 = dma.done %s830, 16
        $region60: #{tpu_custom_call.1} parent=55 // pred_fallthru
          _
      $region56: #{tpu_custom_call.1} parent=5 // pred_fallthru
        _
    $region6: #{tpu_custom_call.1} parent=1 // loop_footer
      %s21 = sadd.s32 1, %s17
    $region7: #{tpu_custom_call.1} parent=1 // loop_footer_branch
      %16 = sbr.rel target = $region3
    $region8: #{tpu_custom_call.1} parent=1 // loop_exit
      _
    %834 = vsyncpa [#allocation4], 1
    %s835 = scalar_lea.sflag [#allocation4], 1
    %836 = vsyncpa %s835, 1

</llo_original>
